<compile_context>
chip_gen: v5e
topology: v5e:2x2
jax: 0.10.0
libtpu: 0.0.40
codegen_flags: <defaults>
</compile_context>

<pallas_src>
import jax
import jax.numpy as jnp
from jax.experimental import pallas as pl
from jax.experimental.pallas import tpu as pltpu

LANE = 128
SUBLANE = 8


def _round_up(n, m):
    return (n + m - 1) // m * m


def _vmem_capacity_bytes():
    """Per-core VMEM capacity; conservative v7x fallback if the query fails."""
    try:
        info = pltpu.get_tpu_info()
        cap = getattr(info, "vmem_capacity_bytes", None)
        if cap:
            return int(cap)
    except Exception:
        pass
    return 64 * 1024 * 1024


# ----------------------------------------------------------------------------
# Kernel
# ----------------------------------------------------------------------------
def gru_cell_kernel(x_ref, h_ref, wx_ref, wh_ref, bx_ref, bhn_ref, hy_ref):
    Hp = hy_ref.shape[-1]          # multiple of 128 by construction
    cdt = wx_ref.dtype             # MXU compute dtype (bf16 or f32)

    h = h_ref[...]                 # f32 [tb, Hp] -- single stream, reused below

    # Two lane-aligned MXU passes, f32 accumulation.  No zero column blocks:
    #   gx = x @ Wx + (bx_r+bh_r | bx_i+bh_i | bx_n)
    #   gh = h @ Wh                      (bh_n added below, before the r* term)
    gx = jnp.dot(x_ref[...], wx_ref[...], preferred_element_type=jnp.float32)
    gx = gx + bx_ref[...]
    gh = jnp.dot(h.astype(cdt), wh_ref[...], preferred_element_type=jnp.float32)

    # All slice offsets are multiples of 128 -> lane-aligned, no relayouts.
    rz = jax.nn.sigmoid(gx[:, :2 * Hp] + gh[:, :2 * Hp])   # r|z in one EUP pass
    r = rz[:, :Hp]
    z = rz[:, Hp:]
    n = jnp.tanh(gx[:, 2 * Hp:] + r * (gh[:, 2 * Hp:] + bhn_ref[...]))

    hf = h.astype(jnp.float32)
    hy_ref[...] = (hf + z * (n - hf)).astype(hy_ref.dtype)  # hy = h + z*(n-h)


# ----------------------------------------------------------------------------
# Parameter repacking (one-time, outside the hot path)
# ----------------------------------------------------------------------------
def prepare_params(wx, wh, bx, bh, *, weight_dtype=jnp.bfloat16):
    """Repack PyTorch-layout params into the lane-aligned two-dot layout.

    wx: x2h.weight [3H, I], wh: h2h.weight [3H, H], bx/bh: [3H].
    Returns:
      wx_big : [Ip, 3Hp] weight_dtype, column blocks [ r | z | n ], zero rows I..Ip
      wh_big : [Hp, 3Hp] weight_dtype, column blocks [ r | z | n ], zero rows H..Hp
      bx_big : [1, 3Hp]  f32, [ bx_r+bh_r | bx_i+bh_i | bx_n ]
      bh_n   : [1, Hp]   f32, bh_n  (added to the h n-block before the r* term)
    with Hp = round_up(H, 128), Ip = round_up(I, 128).
    """
    threeH, I = wx.shape
    H = threeH // 3
    Hp = _round_up(H, LANE)
    Ip = _round_up(I, LANE)

    def gates_T(w, kin, kpad):     # [3H, kin] -> [kpad, 3Hp], blocks [r|z|n]
        blocks = [jnp.pad(w[g * H:(g + 1) * H].T, ((0, kpad - kin), (0, Hp - H)))
                  for g in range(3)]
        return jnp.concatenate(blocks, axis=1)

    wx_big = gates_T(wx, I, Ip).astype(weight_dtype)     # [Ip, 3Hp]
    wh_big = gates_T(wh, H, Hp).astype(weight_dtype)     # [Hp, 3Hp]

    def bpad(b, g):
        return jnp.pad(b[g * H:(g + 1) * H], (0, Hp - H)).reshape(1, Hp)

    bx_big = jnp.concatenate(
        [bpad(bx, 0) + bpad(bh, 0),
         bpad(bx, 1) + bpad(bh, 1),
         bpad(bx, 2)], axis=1).astype(jnp.float32)       # [1, 3Hp]
    bh_n = bpad(bh, 2).astype(jnp.float32)               # [1, Hp]
    return wx_big, wh_big, bx_big, bh_n


# ----------------------------------------------------------------------------
# Wrapper
# ----------------------------------------------------------------------------
def gru_cell(x, hidden, wx_big, wh_big, bx_big, bh_n):
    """x: [..., I] (flattened like x.view(-1, I)), hidden: [B, H]."""
    x = x.reshape(-1, x.shape[-1])
    B, I = x.shape
    Bh, H = hidden.shape
    assert B == Bh
    Hp = bh_n.shape[-1]
    Ip = wx_big.shape[0]
    assert wh_big.shape == (Hp, 3 * Hp) and wx_big.shape == (Ip, 3 * Hp)
    assert I <= Ip and H <= Hp

    cdt = wx_big.dtype                         # MXU compute dtype (bf16 / f32)
    c_it = jnp.dtype(cdt).itemsize
    h_it = jnp.dtype(hidden.dtype).itemsize

    Bp = _round_up(max(B, 1), SUBLANE)

    # x: pad (batch, K) and cast to the MXU dtype here -- this pad materializes
    # the array anyway, so the cast is free and halves the x DMA in bf16 mode.
    x_c = x.astype(cdt) if x.dtype != cdt else x
    x_p = jnp.pad(x_c, ((0, Bp - B), (0, Ip - I))) if (Bp != B or Ip != I) else x_c
    # h: single lane-dense f32 stream (feeds both the dot and the hy update).
    h_p = (jnp.pad(hidden, ((0, Bp - B), (0, Hp - H)))
           if (Bp != B or Hp != H) else hidden)

    # --- batch tile: at least 2 grid programs when Bp >= 16 (v7x megacore) ---
    if Bp <= SUBLANE:
        tb = Bp
    else:
        tb = min(256, _round_up(-(-Bp // 2), SUBLANE))
        while Bp % tb:
            tb -= SUBLANE

    # --- VMEM accounting (weights resident once; activation tiles 2x-buffered;
    #     f32 gate intermediates + in-kernel bf16 cast of h included) ---------
    wbytes = (wx_big.size * c_it + wh_big.size * c_it
              + bx_big.size * 4 + bh_n.size * 4)

    def tile_bytes(t):
        return (2 * t * Ip * c_it          # x block (double-buffered)
                + 2 * t * Hp * h_it        # h block (double-buffered)
                + 2 * t * Hp * h_it        # hy block (double-buffered)
                + 2 * t * 3 * Hp * 4       # gx, gh f32 intermediates
                + t * Hp * c_it            # in-kernel cast of h for the dot
                + 4 * t * Hp * 4)          # rz / n / hy element-wise temps

    cap = _vmem_capacity_bytes()
    budget = int(cap * 0.8)
    while tb > SUBLANE and wbytes + tile_bytes(tb) > budget:
        tb -= SUBLANE
        while Bp % tb:
            tb -= SUBLANE
    if wbytes + tile_bytes(tb) > budget:
        # TODO(synk): tile the K / 3*Hp weight dims with a VMEM f32 accumulator
        # for very large GRUs instead of requiring full weight residency.
        raise NotImplementedError("GRU weights too large for single-pass VMEM residency")

    vmem_limit = int(min(max(wbytes + tile_bytes(tb) + (8 << 20), 32 << 20),
                         int(cap * 0.9)))
    grid = (Bp // tb,)

    cost = pl.CostEstimate(
        flops=2 * Bp * (Ip + Hp) * 3 * Hp,
        transcendentals=3 * Bp * Hp,
        bytes_accessed=(x_p.size * c_it + h_p.size * h_it + wbytes
                        + Bp * Hp * h_it),
    )

    hy_p = pl.pallas_call(
        gru_cell_kernel,
        out_shape=jax.ShapeDtypeStruct((Bp, Hp), hidden.dtype),
        grid_spec=pltpu.PrefetchScalarGridSpec(
            num_scalar_prefetch=0,
            grid=grid,
            in_specs=[
                pl.BlockSpec((tb, Ip), lambda i: (i, 0)),   # x (compute dtype)
                pl.BlockSpec((tb, Hp), lambda i: (i, 0)),   # h (f32, single stream)
                # Whole-array VMEM residents: no grid windowing -> DMA'd once,
                # not double-buffered by the pipeline, shared by all batch tiles.
                pl.BlockSpec(memory_space=pltpu.MemorySpace.VMEM),  # Wx [Ip,3Hp]
                pl.BlockSpec(memory_space=pltpu.MemorySpace.VMEM),  # Wh [Hp,3Hp]
                pl.BlockSpec(memory_space=pltpu.MemorySpace.VMEM),  # bx [1,3Hp]
                pl.BlockSpec(memory_space=pltpu.MemorySpace.VMEM),  # bh_n [1,Hp]
            ],
            out_specs=pl.BlockSpec((tb, Hp), lambda i: (i, 0)),
        ),
        compiler_params=pltpu.CompilerParams(
            dimension_semantics=("parallel",),
            vmem_limit_bytes=vmem_limit,
        ),
        cost_estimate=cost,
    )(x_p, h_p, wx_big, wh_big, bx_big, bh_n)
    return hy_p[:B, :H]


# ----------------------------------------------------------------------------
# Reference + init (PyTorch-style layout)
# ----------------------------------------------------------------------------
def init_params(key, input_size, hidden_size, dtype=jnp.float32):
    std = float(hidden_size) ** -0.5
    k1, k2, k3, k4 = jax.random.split(key, 4)
    wx = jax.random.uniform(k1, (3 * hidden_size, input_size), dtype, -std, std)
    wh = jax.random.uniform(k2, (3 * hidden_size, hidden_size), dtype, -std, std)
    bx = jax.random.uniform(k3, (3 * hidden_size,), dtype, -std, std)
    bh = jax.random.uniform(k4, (3 * hidden_size,), dtype, -std, std)
    return wx, wh, bx, bh


def gru_cell_ref(x, hidden, wx, wh, bx, bh):
    """Pure-JAX replication of the PyTorch forward."""
    x = x.reshape(-1, x.shape[-1])
    gate_x = x @ wx.T + bx
    gate_h = hidden @ wh.T + bh
    H = hidden.shape[-1]
    i_r, i_i, i_n = gate_x[:, :H], gate_x[:, H:2 * H], gate_x[:, 2 * H:]
    h_r, h_i, h_n = gate_h[:, :H], gate_h[:, H:2 * H], gate_h[:, 2 * H:]
    resetgate = jax.nn.sigmoid(i_r + h_r)
    inputgate = jax.nn.sigmoid(i_i + h_i)
    newgate = jnp.tanh(i_n + resetgate * h_n)
    return hidden + inputgate * (newgate - hidden)


if __name__ == "__main__":
    batch = 8
    input_size = 32
    hidden_size = 32

    key = jax.random.PRNGKey(0)
    kx, kh, kp = jax.random.split(key, 3)

    x = jax.random.normal(kx, (batch, input_size), jnp.float32)
    hidden = jax.random.normal(kh, (batch, hidden_size), jnp.float32)
    wx, wh, bx, bh = init_params(kp, input_size, hidden_size)

    hy_ref = gru_cell_ref(x, hidden, wx, wh, bx, bh)

    # 1) f32 weight path: strict check against the pure-JAX reference.
    p32 = prepare_params(wx, wh, bx, bh, weight_dtype=jnp.float32)
    hy32 = jax.block_until_ready(gru_cell(x, hidden, *p32))
    assert hy32.shape == (batch, hidden_size)
    assert jnp.allclose(hy32, hy_ref, atol=5e-5, rtol=5e-5)

    # 2) bf16 weight/activation path (fast MXU path): looser tolerance.
    pbf = prepare_params(wx, wh, bx, bh, weight_dtype=jnp.bfloat16)
    hybf = jax.block_until_ready(gru_cell(x, hidden, *pbf))
    assert hybf.shape == (batch, hidden_size)
    assert jnp.allclose(hybf, hy_ref, atol=3e-2, rtol=3e-2)

    print("KERNEL_OK")
</pallas_src>

<mosaic_0001>
module attributes {stable_mosaic.version = 11 : i64} {
  func.func @gru_cell_kernel(%arg0: i32, %arg1: memref<8x128xf32, #tpu.memory_space<vmem>>, %arg2: memref<8x128xf32, #tpu.memory_space<vmem>>, %arg3: memref<128x384xf32, #tpu.memory_space<vmem>>, %arg4: memref<128x384xf32, #tpu.memory_space<vmem>>, %arg5: memref<1x384xf32, #tpu.memory_space<vmem>>, %arg6: memref<1x128xf32, #tpu.memory_space<vmem>>, %arg7: memref<8x128xf32, #tpu.memory_space<vmem>>) attributes {dimension_semantics = [#tpu.dimension_semantics<parallel>], iteration_bounds = array<i64: 1>, scalar_prefetch = 0 : i64, scratch_operands = 0 : i64, tpu.core_type = #tpu.core_type<tc>, window_params = [{transform_indices = @transform_0, window_bounds = array<i64: 8, 128>}, {transform_indices = @transform_1, window_bounds = array<i64: 8, 128>}, {pipeline_mode = #tpu.pipeline_mode<synchronous>, transform_indices = @transform_2, window_bounds = array<i64: 128, 384>}, {pipeline_mode = #tpu.pipeline_mode<synchronous>, transform_indices = @transform_3, window_bounds = array<i64: 128, 384>}, {pipeline_mode = #tpu.pipeline_mode<synchronous>, transform_indices = @transform_4, window_bounds = array<i64: 1, 384>}, {pipeline_mode = #tpu.pipeline_mode<synchronous>, transform_indices = @transform_5, window_bounds = array<i64: 1, 128>}, {transform_indices = @transform_6, window_bounds = array<i64: 8, 128>}]} {
    %c0 = arith.constant 0 : index
    %c0_0 = arith.constant 0 : index
    %0 = vector.load %arg2[%c0, %c0_0] : memref<8x128xf32, #tpu.memory_space<vmem>>, vector<8x128xf32>
    %c0_1 = arith.constant 0 : index
    %c0_2 = arith.constant 0 : index
    %1 = vector.load %arg1[%c0_1, %c0_2] : memref<8x128xf32, #tpu.memory_space<vmem>>, vector<8x128xf32>
    %c0_3 = arith.constant 0 : index
    %c0_4 = arith.constant 0 : index
    %2 = vector.load %arg3[%c0_3, %c0_4] : memref<128x384xf32, #tpu.memory_space<vmem>>, vector<128x384xf32>
    %cst = arith.constant dense<0.000000e+00> : vector<8x384xf32>
    %3 = tpu.matmul %1, %2, %cst {dimension_numbers = #tpu.dot_dimension_numbers<[1], [0], [0], [1], [0, 0, 1, 1], [], []>} : vector<8x128xf32>, vector<128x384xf32>, vector<8x384xf32> -> vector<8x384xf32>
    %c0_5 = arith.constant 0 : index
    %c0_6 = arith.constant 0 : index
    %4 = vector.load %arg5[%c0_5, %c0_6] : memref<1x384xf32, #tpu.memory_space<vmem>>, vector<1x384xf32>
    %5 = vector.broadcast %4 : vector<1x384xf32> to vector<8x384xf32>
    %6 = arith.addf %3, %5 : vector<8x384xf32>
    %c0_7 = arith.constant 0 : index
    %c0_8 = arith.constant 0 : index
    %7 = vector.load %arg4[%c0_7, %c0_8] : memref<128x384xf32, #tpu.memory_space<vmem>>, vector<128x384xf32>
    %cst_9 = arith.constant dense<0.000000e+00> : vector<8x384xf32>
    %8 = tpu.matmul %0, %7, %cst_9 {dimension_numbers = #tpu.dot_dimension_numbers<[1], [0], [0], [1], [0, 0, 1, 1], [], []>} : vector<8x128xf32>, vector<128x384xf32>, vector<8x384xf32> -> vector<8x384xf32>
    %9 = vector.extract_strided_slice %6 {offsets = [0, 0], sizes = [8, 256], strides = [1, 1]} : vector<8x384xf32> to vector<8x256xf32>
    %10 = vector.extract_strided_slice %8 {offsets = [0, 0], sizes = [8, 256], strides = [1, 1]} : vector<8x384xf32> to vector<8x256xf32>
    %11 = arith.addf %9, %10 : vector<8x256xf32>
    %12 = arith.negf %11 : vector<8x256xf32>
    %13 = math.exp %12 : vector<8x256xf32>
    %cst_10 = arith.constant 1.000000e+00 : f32
    %14 = vector.broadcast %cst_10 : f32 to vector<8x256xf32>
    %15 = arith.addf %14, %13 : vector<8x256xf32>
    %16 = arith.divf %14, %15 : vector<8x256xf32>
    %17 = vector.extract_strided_slice %16 {offsets = [0, 0], sizes = [8, 128], strides = [1, 1]} : vector<8x256xf32> to vector<8x128xf32>
    %18 = vector.extract_strided_slice %16 {offsets = [0, 128], sizes = [8, 128], strides = [1, 1]} : vector<8x256xf32> to vector<8x128xf32>
    %19 = vector.extract_strided_slice %6 {offsets = [0, 256], sizes = [8, 128], strides = [1, 1]} : vector<8x384xf32> to vector<8x128xf32>
    %20 = vector.extract_strided_slice %8 {offsets = [0, 256], sizes = [8, 128], strides = [1, 1]} : vector<8x384xf32> to vector<8x128xf32>
    %c0_11 = arith.constant 0 : index
    %c0_12 = arith.constant 0 : index
    %21 = vector.load %arg6[%c0_11, %c0_12] : memref<1x128xf32, #tpu.memory_space<vmem>>, vector<1x128xf32>
    %22 = vector.broadcast %21 : vector<1x128xf32> to vector<8x128xf32>
    %23 = arith.addf %20, %22 : vector<8x128xf32>
    %24 = arith.mulf %17, %23 : vector<8x128xf32>
    %25 = arith.addf %19, %24 : vector<8x128xf32>
    %26 = math.tanh %25 : vector<8x128xf32>
    %27 = arith.subf %26, %0 : vector<8x128xf32>
    %28 = arith.mulf %18, %27 : vector<8x128xf32>
    %29 = arith.addf %0, %28 : vector<8x128xf32>
    %c0_13 = arith.constant 0 : index
    %c0_14 = arith.constant 0 : index
    %30 = vector.load %arg7[%c0_13, %c0_14] : memref<8x128xf32, #tpu.memory_space<vmem>>, vector<8x128xf32>
    tpu.vector_store %arg7[%c0_13, %c0_14], %29 {strides = array<i32>} : memref<8x128xf32, #tpu.memory_space<vmem>>, vector<8x128xf32>,
    return
  }
  func.func @transform_0(%arg0: i32) -> (i32, i32) {
    %c0_i32 = arith.constant 0 : i32
    %c0_i32_0 = arith.constant 0 : i32
    return %arg0, %c0_i32 : i32, i32
  }
  func.func @transform_1(%arg0: i32) -> (i32, i32) {
    %c0_i32 = arith.constant 0 : i32
    %c0_i32_0 = arith.constant 0 : i32
    return %arg0, %c0_i32 : i32, i32
  }
  func.func @transform_2(%arg0: i32) -> (i32, i32) {
    %c0_i32 = arith.constant 0 : i32
    %c0_i32_0 = arith.constant 0 : i32
    %c0_i32_1 = arith.constant 0 : i32
    return %c0_i32, %c0_i32_0 : i32, i32
  }
  func.func @transform_3(%arg0: i32) -> (i32, i32) {
    %c0_i32 = arith.constant 0 : i32
    %c0_i32_0 = arith.constant 0 : i32
    %c0_i32_1 = arith.constant 0 : i32
    return %c0_i32, %c0_i32_0 : i32, i32
  }
  func.func @transform_4(%arg0: i32) -> (i32, i32) {
    %c0_i32 = arith.constant 0 : i32
    %c0_i32_0 = arith.constant 0 : i32
    %c0_i32_1 = arith.constant 0 : i32
    return %c0_i32, %c0_i32_0 : i32, i32
  }
  func.func @transform_5(%arg0: i32) -> (i32, i32) {
    %c0_i32 = arith.constant 0 : i32
    %c0_i32_0 = arith.constant 0 : i32
    %c0_i32_1 = arith.constant 0 : i32
    return %c0_i32, %c0_i32_0 : i32, i32
  }
  func.func @transform_6(%arg0: i32) -> (i32, i32) {
    %c0_i32 = arith.constant 0 : i32
    %c0_i32_0 = arith.constant 0 : i32
    return %arg0, %c0_i32 : i32, i32
  }
}

</mosaic_0001>

<llo_original>
// kernel: tpu_custom_call.1
$region0: #{tpu_custom_call.1}
  #allocation0 [shape = 'u32[]', space=smem, size = 0x4, offset = 0x4, fixed_abs, tag = 'smem constant byte address 0x4 - core index']
  #allocation1 [shape = 'u32[72,128]{1,0:T(1,128)}', space=vmem, size = 0x9000, scoped, tag = 'internal scratch']
  %s0 = inlined_call_operand.hbm [shape: f32[8,128], index: 0, kind: input, shape index: {}]
  %s1 = inlined_call_operand.hbm [shape: f32[8,128], index: 1, kind: input, shape index: {}]
  %s2 = inlined_call_operand.hbm [shape: f32[128,384], index: 2, kind: input, shape index: {}]
  %s3 = inlined_call_operand.hbm [shape: f32[128,384], index: 3, kind: input, shape index: {}]
  %s4 = inlined_call_operand.vmem [shape: f32[1,384], index: 4, kind: input, shape index: {}]
  %s5 = inlined_call_operand.vmem [shape: f32[1,128], index: 5, kind: input, shape index: {}]
  %s6 = inlined_call_operand.hbm [shape: f32[8,128], index: 6, kind: output, shape index: {}]
  %s7 = sld [smem:[#allocation0]]
  $region50: #{tpu_custom_call.1} parent=0
    _
  %s9 = ssub.s32 1, %s7
  %s10 = scalar_select 0, %s9, %s7
  $region1: #{tpu_custom_call.1} parent=0
    #allocation2 [shape = 'u8[4096]{0}', space=vmem, size = 0x1000, scoped, tag = 'input window, operand 0, single buffered']
    #allocation3 [shape = 's32[1]{0}', space=sflag, size = 0x4, scoped, tag = 'scoped memory for tpu_custom_call.1']
    #allocation4 [shape = 's32[1]{0}', space=sflag, size = 0x4, scoped, tag = 'scoped memory for tpu_custom_call.1']
    #allocation5 [shape = 'u8[4096]{0}', space=vmem, size = 0x1000, scoped, tag = 'input window, operand 1, single buffered']
    #allocation6 [shape = 's32[1]{0}', space=sflag, size = 0x4, scoped, tag = 'scoped memory for tpu_custom_call.1']
    #allocation7 [shape = 'u8[196608]{0}', space=vmem, size = 0x30000, scoped, tag = 'input window, operand 2, single buffered']
    #allocation8 [shape = 'u8[196608]{0}', space=vmem, size = 0x30000, scoped, tag = 'input window, operand 3, single buffered']
    #allocation9 [shape = 's32[1]{0}', space=sflag, size = 0x4, scoped, tag = 'scoped memory for tpu_custom_call.1']
    #allocation10 [shape = 'u8[4096]{0}', space=vmem, size = 0x1000, scoped, tag = 'output window, operand 0, single buffered']
    %11 = vsyncpa [#allocation3], 0
    %12 = vsyncpa [#allocation6], 0
    %13 = vsyncpa [#allocation9], 0
    %14 = vsyncpa [#allocation4], 0
    // Predicated region
    $region2: #{tpu_custom_call.1} parent=1 // pred_check
      _
    $region3: #{tpu_custom_call.1} parent=1 // pred_check_branch
      %16 = sbr.rel (0) target = $region5
    $region4: #{tpu_custom_call.1} parent=1 // pred_region
      %18 = vsyncadd [#allocation3], 0
      %s20 = sshll.u32 %s0, 4
      %s21 = int_to_ptr.hbm [resolvable:$true] %s20
      %s22 = sshll.u32 [#allocation2], 4
      %s23 = int_to_ptr.vmem [resolvable:$true] %s22
      %25 = dma.hbm_to_vmem [thread:$0]  %s21, 128, %s23, [#allocation3]
    $region5: #{tpu_custom_call.1} parent=1 // pred_fallthru
      _
    // Predicated region
    $region6: #{tpu_custom_call.1} parent=1 // pred_check
      _
    $region7: #{tpu_custom_call.1} parent=1 // pred_check_branch
      %27 = sbr.rel (0) target = $region9
    $region8: #{tpu_custom_call.1} parent=1 // pred_region
      %29 = vsyncadd [#allocation6], 0
      %s31 = sshll.u32 %s1, 4
      %s32 = int_to_ptr.hbm [resolvable:$true] %s31
      %s33 = sshll.u32 [#allocation5], 4
      %s34 = int_to_ptr.vmem [resolvable:$true] %s33
      %36 = dma.hbm_to_vmem [thread:$0]  %s32, 128, %s34, [#allocation6]
    $region9: #{tpu_custom_call.1} parent=1 // pred_fallthru
      _
    // Predicated region
    $region10: #{tpu_custom_call.1} parent=1 // pred_check
      _
    $region11: #{tpu_custom_call.1} parent=1 // pred_check_branch
      %38 = sbr.rel (0) target = $region13
    $region12: #{tpu_custom_call.1} parent=1 // pred_region
      %40 = vsyncadd [#allocation6], 0
      %s41 = sshll.u32 %s2, 4
      %s42 = int_to_ptr.hbm [resolvable:$true] %s41
      %s43 = sshll.u32 [#allocation7], 4
      %s44 = int_to_ptr.vmem [resolvable:$true] %s43
      %49 = dma.hbm_to_vmem [thread:$0]  %s42, 6144, %s44, [#allocation6], 384, 384, 24
    $region13: #{tpu_custom_call.1} parent=1 // pred_fallthru
      _
    // Predicated region
    $region14: #{tpu_custom_call.1} parent=1 // pred_check
      _
    $region15: #{tpu_custom_call.1} parent=1 // pred_check_branch
      %51 = sbr.rel (0) target = $region17
    $region16: #{tpu_custom_call.1} parent=1 // pred_region
      %53 = vsyncadd [#allocation9], 0
      %s54 = sshll.u32 %s3, 4
      %s55 = int_to_ptr.hbm [resolvable:$true] %s54
      %s56 = sshll.u32 [#allocation8], 4
      %s57 = int_to_ptr.vmem [resolvable:$true] %s56
      %62 = dma.hbm_to_vmem [thread:$0]  %s55, 6144, %s57, [#allocation9], 384, 384, 24
    $region17: #{tpu_custom_call.1} parent=1 // pred_fallthru
      _
    // Predicated region
    $region18: #{tpu_custom_call.1} parent=1 // pred_check
      _
    $region19: #{tpu_custom_call.1} parent=1 // pred_check_branch
      %64 = sbr.rel (0) target = $region21
    $region20: #{tpu_custom_call.1} parent=1 // pred_region
      _
    $region21: #{tpu_custom_call.1} parent=1 // pred_fallthru
      _
    // Predicated region
    $region22: #{tpu_custom_call.1} parent=1 // pred_check
      _
    $region23: #{tpu_custom_call.1} parent=1 // pred_check_branch
      %66 = sbr.rel (0) target = $region25
    $region24: #{tpu_custom_call.1} parent=1 // pred_region
      _
    $region25: #{tpu_custom_call.1} parent=1 // pred_fallthru
      _
    // Predicated region
    $region26: #{tpu_custom_call.1} parent=1 // pred_check
      _
    $region27: #{tpu_custom_call.1} parent=1 // pred_check_branch
      %68 = sbr.rel (0) target = $region29
    $region28: #{tpu_custom_call.1} parent=1 // pred_region
      %70 = dma.done [#allocation3], 128
    $region29: #{tpu_custom_call.1} parent=1 // pred_fallthru
      _
    // Predicated region
    $region30: #{tpu_custom_call.1} parent=1 // pred_check
      _
    $region31: #{tpu_custom_call.1} parent=1 // pred_check_branch
      %72 = sbr.rel (0) target = $region33
    $region32: #{tpu_custom_call.1} parent=1 // pred_region
      %74 = dma.done [#allocation6], 128
    $region33: #{tpu_custom_call.1} parent=1 // pred_fallthru
      _
    // Predicated region
    $region34: #{tpu_custom_call.1} parent=1 // pred_check
      _
    $region35: #{tpu_custom_call.1} parent=1 // pred_check_branch
      %76 = sbr.rel (0) target = $region37
    $region36: #{tpu_custom_call.1} parent=1 // pred_region
      %78 = dma.done [#allocation6], 6144
    $region37: #{tpu_custom_call.1} parent=1 // pred_fallthru
      _
    // Predicated region
    $region38: #{tpu_custom_call.1} parent=1 // pred_check
      _
    $region39: #{tpu_custom_call.1} parent=1 // pred_check_branch
      %80 = sbr.rel (0) target = $region41
    $region40: #{tpu_custom_call.1} parent=1 // pred_region
      %82 = dma.done [#allocation9], 6144
    $region41: #{tpu_custom_call.1} parent=1 // pred_fallthru
      _
    %v83 = vld [vmem:[#allocation5] sm:$0xff]
    %v84 = vld [vmem:[#allocation2] sm:$0xff]
    %v85 = vld [vmem:[#allocation7] sm:$0xff]
    %v86 = vld [vmem:[#allocation7 + $0x8] sm:$0xff]
    %v87 = vld [vmem:[#allocation7 + $0x10] sm:$0xff]
    %v88 = vld [vmem:[#allocation7 + $0x18] sm:$0xff]
    %v89 = vld [vmem:[#allocation7 + $0x20] sm:$0xff]
    %v90 = vld [vmem:[#allocation7 + $0x28] sm:$0xff]
    %v91 = vld [vmem:[#allocation7 + $0x30] sm:$0xff]
    %v92 = vld [vmem:[#allocation7 + $0x38] sm:$0xff]
    %v93 = vld [vmem:[#allocation7 + $0x40] sm:$0xff]
    %v94 = vld [vmem:[#allocation7 + $0x48] sm:$0xff]
    %v95 = vld [vmem:[#allocation7 + $0x50] sm:$0xff]
    %v96 = vld [vmem:[#allocation7 + $0x58] sm:$0xff]
    %v97 = vld [vmem:[#allocation7 + $0x60] sm:$0xff]
    %v98 = vld [vmem:[#allocation7 + $0x68] sm:$0xff]
    %v99 = vld [vmem:[#allocation7 + $0x70] sm:$0xff]
    %v100 = vld [vmem:[#allocation7 + $0x78] sm:$0xff]
    %v101 = vld [vmem:[#allocation7 + $0x80] sm:$0xff]
    %v102 = vld [vmem:[#allocation7 + $0x88] sm:$0xff]
    %v103 = vld [vmem:[#allocation7 + $0x90] sm:$0xff]
    %v104 = vld [vmem:[#allocation7 + $0x98] sm:$0xff]
    %v105 = vld [vmem:[#allocation7 + $0xa0] sm:$0xff]
    %v106 = vld [vmem:[#allocation7 + $0xa8] sm:$0xff]
    %v107 = vld [vmem:[#allocation7 + $0xb0] sm:$0xff]
    %v108 = vld [vmem:[#allocation7 + $0xb8] sm:$0xff]
    %v109 = vld [vmem:[#allocation7 + $0xc0] sm:$0xff]
    %v110 = vld [vmem:[#allocation7 + $0xc8] sm:$0xff]
    %v111 = vld [vmem:[#allocation7 + $0xd0] sm:$0xff]
    %v112 = vld [vmem:[#allocation7 + $0xd8] sm:$0xff]
    %v113 = vld [vmem:[#allocation7 + $0xe0] sm:$0xff]
    %v114 = vld [vmem:[#allocation7 + $0xe8] sm:$0xff]
    %v115 = vld [vmem:[#allocation7 + $0xf0] sm:$0xff]
    %v116 = vld [vmem:[#allocation7 + $0xf8] sm:$0xff]
    %v117 = vld [vmem:[#allocation7 + $0x100] sm:$0xff]
    %v118 = vld [vmem:[#allocation7 + $0x108] sm:$0xff]
    %v119 = vld [vmem:[#allocation7 + $0x110] sm:$0xff]
    %v120 = vld [vmem:[#allocation7 + $0x118] sm:$0xff]
    %v121 = vld [vmem:[#allocation7 + $0x120] sm:$0xff]
    %v122 = vld [vmem:[#allocation7 + $0x128] sm:$0xff]
    %v123 = vld [vmem:[#allocation7 + $0x130] sm:$0xff]
    %v124 = vld [vmem:[#allocation7 + $0x138] sm:$0xff]
    %v125 = vld [vmem:[#allocation7 + $0x140] sm:$0xff]
    %v126 = vld [vmem:[#allocation7 + $0x148] sm:$0xff]
    %v127 = vld [vmem:[#allocation7 + $0x150] sm:$0xff]
    %v128 = vld [vmem:[#allocation7 + $0x158] sm:$0xff]
    %v129 = vld [vmem:[#allocation7 + $0x160] sm:$0xff]
    %v130 = vld [vmem:[#allocation7 + $0x168] sm:$0xff]
    %v131 = vld [vmem:[#allocation7 + $0x170] sm:$0xff]
    %v132 = vld [vmem:[#allocation7 + $0x178] sm:$0xff]
    %v133 = vld [vmem:[%s4] sm:$0x7]
    %v135 = vperm.slane %v133, 0
    %v136 = vperm.slane %v133, 1
    %v137 = vperm.slane %v133, 2
    %141 = vmatpush.msra.mxu0 %v130
    %142 = vmatpush.msra.mxu0 %v127
    %143 = vmatpush.msra.mxu0 %v124
    %144 = vmatpush.msra.mxu0 %v121
    %145 = vmatpush.msra.mxu0 %v118
    %146 = vmatpush.msra.mxu0 %v115
    %147 = vmatpush.msra.mxu0 %v112
    %148 = vmatpush.msra.mxu0 %v109
    %149 = vmatpush.msra.mxu0 %v106
    %150 = vmatpush.msra.mxu0 %v103
    %151 = vmatpush.msra.mxu0 %v100
    %152 = vmatpush.msra.mxu0 %v97
    %153 = vmatpush.msra.mxu0 %v94
    %154 = vmatpush.msra.mxu0 %v91
    %155 = vmatpush.msra.mxu0 %v88
    %156 = vmatpush.msra.mxu0 %v85
    %157 = vmatmul.f32.gmra.mxu0 %v84
    %v158 = vpop.f32.mrf.mxu0
    %v159 = vadd.f32 %v135, %v158
    %160 = vdwg.mxu0
    %161 = vmatpush.msra.mxu0 %v131
    %162 = vmatpush.msra.mxu0 %v128
    %163 = vmatpush.msra.mxu0 %v125
    %164 = vmatpush.msra.mxu0 %v122
    %165 = vmatpush.msra.mxu0 %v119
    %166 = vmatpush.msra.mxu0 %v116
    %167 = vmatpush.msra.mxu0 %v113
    %168 = vmatpush.msra.mxu0 %v110
    %169 = vmatpush.msra.mxu0 %v107
    %170 = vmatpush.msra.mxu0 %v104
    %171 = vmatpush.msra.mxu0 %v101
    %172 = vmatpush.msra.mxu0 %v98
    %173 = vmatpush.msra.mxu0 %v95
    %174 = vmatpush.msra.mxu0 %v92
    %175 = vmatpush.msra.mxu0 %v89
    %176 = vmatpush.msra.mxu0 %v86
    %177 = vmatmul.f32.gmra.mxu0 %v84
    %v178 = vpop.f32.mrf.mxu0
    %v179 = vadd.f32 %v136, %v178
    %180 = vdwg.mxu0
    %181 = vmatpush.msra.mxu0 %v132
    %182 = vmatpush.msra.mxu0 %v129
    %183 = vmatpush.msra.mxu0 %v126
    %184 = vmatpush.msra.mxu0 %v123
    %185 = vmatpush.msra.mxu0 %v120
    %186 = vmatpush.msra.mxu0 %v117
    %187 = vmatpush.msra.mxu0 %v114
    %188 = vmatpush.msra.mxu0 %v111
    %189 = vmatpush.msra.mxu0 %v108
    %190 = vmatpush.msra.mxu0 %v105
    %191 = vmatpush.msra.mxu0 %v102
    %192 = vmatpush.msra.mxu0 %v99
    %193 = vmatpush.msra.mxu0 %v96
    %194 = vmatpush.msra.mxu0 %v93
    %195 = vmatpush.msra.mxu0 %v90
    %196 = vmatpush.msra.mxu0 %v87
    %197 = vmatmul.f32.gmra.mxu0 %v84
    %v198 = vpop.f32.mrf.mxu0
    %v199 = vadd.f32 %v137, %v198
    %200 = vdwg.mxu0
    %v201 = vld [vmem:[#allocation8] sm:$0xff]
    %v202 = vld [vmem:[#allocation8 + $0x8] sm:$0xff]
    %v203 = vld [vmem:[#allocation8 + $0x10] sm:$0xff]
    %v204 = vld [vmem:[#allocation8 + $0x18] sm:$0xff]
    %v205 = vld [vmem:[#allocation8 + $0x20] sm:$0xff]
    %v206 = vld [vmem:[#allocation8 + $0x28] sm:$0xff]
    %v207 = vld [vmem:[#allocation8 + $0x30] sm:$0xff]
    %v208 = vld [vmem:[#allocation8 + $0x38] sm:$0xff]
    %v209 = vld [vmem:[#allocation8 + $0x40] sm:$0xff]
    %v210 = vld [vmem:[#allocation8 + $0x48] sm:$0xff]
    %v211 = vld [vmem:[#allocation8 + $0x50] sm:$0xff]
    %v212 = vld [vmem:[#allocation8 + $0x58] sm:$0xff]
    %v213 = vld [vmem:[#allocation8 + $0x60] sm:$0xff]
    %v214 = vld [vmem:[#allocation8 + $0x68] sm:$0xff]
    %v215 = vld [vmem:[#allocation8 + $0x70] sm:$0xff]
    %v216 = vld [vmem:[#allocation8 + $0x78] sm:$0xff]
    %v217 = vld [vmem:[#allocation8 + $0x80] sm:$0xff]
    %v218 = vld [vmem:[#allocation8 + $0x88] sm:$0xff]
    %v219 = vld [vmem:[#allocation8 + $0x90] sm:$0xff]
    %v220 = vld [vmem:[#allocation8 + $0x98] sm:$0xff]
    %v221 = vld [vmem:[#allocation8 + $0xa0] sm:$0xff]
    %v222 = vld [vmem:[#allocation8 + $0xa8] sm:$0xff]
    %v223 = vld [vmem:[#allocation8 + $0xb0] sm:$0xff]
    %v224 = vld [vmem:[#allocation8 + $0xb8] sm:$0xff]
    %v225 = vld [vmem:[#allocation8 + $0xc0] sm:$0xff]
    %v226 = vld [vmem:[#allocation8 + $0xc8] sm:$0xff]
    %v227 = vld [vmem:[#allocation8 + $0xd0] sm:$0xff]
    %v228 = vld [vmem:[#allocation8 + $0xd8] sm:$0xff]
    %v229 = vld [vmem:[#allocation8 + $0xe0] sm:$0xff]
    %v230 = vld [vmem:[#allocation8 + $0xe8] sm:$0xff]
    %v231 = vld [vmem:[#allocation8 + $0xf0] sm:$0xff]
    %v232 = vld [vmem:[#allocation8 + $0xf8] sm:$0xff]
    %v233 = vld [vmem:[#allocation8 + $0x100] sm:$0xff]
    %v234 = vld [vmem:[#allocation8 + $0x108] sm:$0xff]
    %v235 = vld [vmem:[#allocation8 + $0x110] sm:$0xff]
    %v236 = vld [vmem:[#allocation8 + $0x118] sm:$0xff]
    %v237 = vld [vmem:[#allocation8 + $0x120] sm:$0xff]
    %v238 = vld [vmem:[#allocation8 + $0x128] sm:$0xff]
    %v239 = vld [vmem:[#allocation8 + $0x130] sm:$0xff]
    %v240 = vld [vmem:[#allocation8 + $0x138] sm:$0xff]
    %v241 = vld [vmem:[#allocation8 + $0x140] sm:$0xff]
    %v242 = vld [vmem:[#allocation8 + $0x148] sm:$0xff]
    %v243 = vld [vmem:[#allocation8 + $0x150] sm:$0xff]
    %v244 = vld [vmem:[#allocation8 + $0x158] sm:$0xff]
    %v245 = vld [vmem:[#allocation8 + $0x160] sm:$0xff]
    %v246 = vld [vmem:[#allocation8 + $0x168] sm:$0xff]
    %v247 = vld [vmem:[#allocation8 + $0x170] sm:$0xff]
    %v248 = vld [vmem:[#allocation8 + $0x178] sm:$0xff]
    %249 = vmatpush.msra.mxu0 %v246
    %250 = vmatpush.msra.mxu0 %v243
    %251 = vmatpush.msra.mxu0 %v240
    %252 = vmatpush.msra.mxu0 %v237
    %253 = vmatpush.msra.mxu0 %v234
    %254 = vmatpush.msra.mxu0 %v231
    %255 = vmatpush.msra.mxu0 %v228
    %256 = vmatpush.msra.mxu0 %v225
    %257 = vmatpush.msra.mxu0 %v222
    %258 = vmatpush.msra.mxu0 %v219
    %259 = vmatpush.msra.mxu0 %v216
    %260 = vmatpush.msra.mxu0 %v213
    %261 = vmatpush.msra.mxu0 %v210
    %262 = vmatpush.msra.mxu0 %v207
    %263 = vmatpush.msra.mxu0 %v204
    %264 = vmatpush.msra.mxu0 %v201
    %265 = vmatmul.f32.gmra.mxu0 %v83
    %v266 = vpop.f32.mrf.mxu0
    %v267 = vadd.f32 0.0, %v266
    %268 = vdwg.mxu0
    %269 = vmatpush.msra.mxu0 %v247
    %270 = vmatpush.msra.mxu0 %v244
    %271 = vmatpush.msra.mxu0 %v241
    %272 = vmatpush.msra.mxu0 %v238
    %273 = vmatpush.msra.mxu0 %v235
    %274 = vmatpush.msra.mxu0 %v232
    %275 = vmatpush.msra.mxu0 %v229
    %276 = vmatpush.msra.mxu0 %v226
    %277 = vmatpush.msra.mxu0 %v223
    %278 = vmatpush.msra.mxu0 %v220
    %279 = vmatpush.msra.mxu0 %v217
    %280 = vmatpush.msra.mxu0 %v214
    %281 = vmatpush.msra.mxu0 %v211
    %282 = vmatpush.msra.mxu0 %v208
    %283 = vmatpush.msra.mxu0 %v205
    %284 = vmatpush.msra.mxu0 %v202
    %285 = vmatmul.f32.gmra.mxu0 %v83
    %v286 = vpop.f32.mrf.mxu0
    %v287 = vadd.f32 0.0, %v286
    %288 = vdwg.mxu0
    %289 = vmatpush.msra.mxu0 %v248
    %290 = vmatpush.msra.mxu0 %v245
    %291 = vmatpush.msra.mxu0 %v242
    %292 = vmatpush.msra.mxu0 %v239
    %293 = vmatpush.msra.mxu0 %v236
    %294 = vmatpush.msra.mxu0 %v233
    %295 = vmatpush.msra.mxu0 %v230
    %296 = vmatpush.msra.mxu0 %v227
    %297 = vmatpush.msra.mxu0 %v224
    %298 = vmatpush.msra.mxu0 %v221
    %299 = vmatpush.msra.mxu0 %v218
    %300 = vmatpush.msra.mxu0 %v215
    %301 = vmatpush.msra.mxu0 %v212
    %302 = vmatpush.msra.mxu0 %v209
    %303 = vmatpush.msra.mxu0 %v206
    %304 = vmatpush.msra.mxu0 %v203
    %305 = vmatmul.f32.gmra.mxu0 %v83
    %v306 = vpop.f32.mrf.mxu0
    %v307 = vadd.f32 0.0, %v306
    %308 = vdwg.mxu0
    %v309 = vadd.f32 %v159, %v267
    %v310 = vadd.f32 %v179, %v287
    %v311 = vxor.u32 %v309, 2147483648
    %v312 = vxor.u32 %v310, 2147483648
    %v313 = vmul.f32 %v311, 1.442695
    %v314 = vpow.pop %v313
    %v315 = vmul.f32 %v312, 1.442695
    %v316 = vpow.pop %v315
    %v317 = vadd.f32 %v314, 1.0
    %v318 = vadd.f32 %v316, 1.0
    %v319 = vrcp.pop %v317
    %v320 = vmul.f32 %v317, %v319
    %v321 = vsub.f32 1.0, %v320
    %v322 = vmul.f32 %v319, %v321
    %v323 = vadd.f32 %v319, %v322
    %vm324 = vweird.f32 %v317
    %vm325 = vweird.f32 %v319
    %vm326 = vmor %vm324, %vm325
    %v327 = vsel %vm326, %v319, %v323
    %v328 = vand.u32 2147483647, %v317
    %vm329 = vcmp.eq.f32.partialorder %v328, 8.507059e+37
    %v330 = vand.u32 %v317, 2147483648
    %v331 = vor.u32 1.1754944e-38, %v330
    %v332 = vsel %vm329, %v331, %v327
    %v333 = vmul.f32 1.0, %v332
    %v334 = vrcp.pop %v318
    %v335 = vmul.f32 %v318, %v334
    %v336 = vsub.f32 1.0, %v335
    %v337 = vmul.f32 %v334, %v336
    %v338 = vadd.f32 %v334, %v337
    %vm339 = vweird.f32 %v318
    %vm340 = vweird.f32 %v334
    %vm341 = vmor %vm339, %vm340
    %v342 = vsel %vm341, %v334, %v338
    %v343 = vand.u32 2147483647, %v318
    %vm344 = vcmp.eq.f32.partialorder %v343, 8.507059e+37
    %v345 = vand.u32 %v318, 2147483648
    %v346 = vor.u32 1.1754944e-38, %v345
    %v347 = vsel %vm344, %v346, %v342
    %v348 = vmul.f32 1.0, %v347
    %v349 = vld [vmem:[%s5] sm:$0x1]
    %v351 = vperm.slane %v349, 0
    %v353 = vadd.f32 %v307, %v351
    %v354 = vmul.f32 %v333, %v353
    %v355 = vadd.f32 %v199, %v354
    %v356 = vtanh.pop %v355
    %v357 = vsub.f32 %v356, %v83
    %v358 = vmul.f32 %v348, %v357
    %v359 = vadd.f32 %v83, %v358
    %360 = vst [vmem:[#allocation10] sm:$0xff] %v359
    // Predicated region
    $region42: #{tpu_custom_call.1} parent=1 // pred_check
      _
    $region43: #{tpu_custom_call.1} parent=1 // pred_check_branch
      %362 = sbr.rel (0) target = $region45
    $region44: #{tpu_custom_call.1} parent=1 // pred_region
      %364 = vsyncadd [#allocation4], 0
      %s366 = sshll.u32 [#allocation10], 4
      %s367 = int_to_ptr.vmem [resolvable:$true] %s366
      %s368 = sshll.u32 %s6, 4
      %s369 = int_to_ptr.hbm [resolvable:$true] %s368
      %371 = dma.vmem_to_hbm [thread:$0]  %s367, 128, %s369, [#allocation4]
    $region45: #{tpu_custom_call.1} parent=1 // pred_fallthru
      _
    // Predicated region
    $region46: #{tpu_custom_call.1} parent=1 // pred_check
      _
    $region47: #{tpu_custom_call.1} parent=1 // pred_check_branch
      %373 = sbr.rel (0) target = $region49
    $region48: #{tpu_custom_call.1} parent=1 // pred_region
      %375 = dma.done [#allocation4], 128
    $region49: #{tpu_custom_call.1} parent=1 // pred_fallthru
      _
    %376 = vsyncpa [#allocation3], 1
    %377 = vsyncpa [#allocation6], 1
    %378 = vsyncpa [#allocation9], 1
    %379 = vsyncpa [#allocation4], 1

</llo_original>
